<compile_context>
chip_gen: v5e
topology: v5e:2x2
jax: 0.10.0
libtpu: 0.0.40
codegen_flags: <defaults>
</compile_context>

<pallas_src>
import functools

import jax
import jax.numpy as jnp
from jax import lax
from jax.experimental import pallas as pl
from jax.experimental.pallas import tpu as pltpu
import numpy as np


def _round_up(x, m):
    return (x + m - 1) // m * m


def _pad2(a, shape, dtype):
    out = jnp.zeros(shape, dtype)
    return out.at[: a.shape[0], : a.shape[1]].set(a.astype(dtype))


# --------------------------------------------------------------------------
# Kernel 1/2: one SAGE('mean') layer, gridded over node-row blocks.
#   out_block = h_self @ W_self + (A_block @ H_all) @ W_neigh + b  [+ ReLU]
# --------------------------------------------------------------------------
def _sage_layer_kernel(a_ref, h_ref, ws_ref, wn_ref, b_ref, o_ref, *, apply_relu):
    block_rows = o_ref.shape[0]
    i = pl.program_id(0)
    row0 = pl.multiple_of(i * block_rows, block_rows)

    h_all = h_ref[...]                                   # (N_pad, F_pad)  bf16
    h_self = h_ref[pl.ds(row0, block_rows), :]           # (BN,  F_pad)    bf16

    # Mean aggregation: rows of the mean-normalized adjacency times all feats.
    agg = jnp.dot(a_ref[...], h_all, preferred_element_type=jnp.float32)

    out = (jnp.dot(h_self, ws_ref[...], preferred_element_type=jnp.float32)
           + jnp.dot(agg.astype(jnp.bfloat16), wn_ref[...],
                     preferred_element_type=jnp.float32)
           + b_ref[...])
    if apply_relu:
        out = jnp.maximum(out, 0.0)
    o_ref[...] = out.astype(o_ref.dtype)


def _sage_layer(a_pad, h_pad, w_self, w_neigh, bias, *, block_rows,
                apply_relu, out_dtype):
    n_pad = a_pad.shape[0]
    f_in = h_pad.shape[1]
    f_out = w_self.shape[1]
    grid = (n_pad // block_rows,)
    kernel = functools.partial(_sage_layer_kernel, apply_relu=apply_relu)
    return pl.pallas_call(
        kernel,
        out_shape=jax.ShapeDtypeStruct((n_pad, f_out), out_dtype),
        grid_spec=pltpu.PrefetchScalarGridSpec(
            num_scalar_prefetch=0,
            grid=grid,
            in_specs=[
                pl.BlockSpec((block_rows, n_pad), lambda i: (i, 0)),   # A rows
                pl.BlockSpec((n_pad, f_in), lambda i: (0, 0)),         # H (all)
                pl.BlockSpec((f_in, f_out), lambda i: (0, 0)),         # W_self
                pl.BlockSpec((f_in, f_out), lambda i: (0, 0)),         # W_neigh
                pl.BlockSpec((1, f_out), lambda i: (0, 0)),            # bias
            ],
            out_specs=pl.BlockSpec((block_rows, f_out), lambda i: (i, 0)),
        ),
        compiler_params=pltpu.CompilerParams(
            dimension_semantics=("parallel",)),
    )(a_pad, h_pad, w_self, w_neigh, bias)


# --------------------------------------------------------------------------
# Kernel 3: DotProductPredictor.
#   Scalar-prefetched src/dst indices -> dynamic row gather of h2 into VMEM
#   scratch, elementwise product, then ones(1,D) @ (hu*hv)^T on the MXU to
#   emit a lane-dense (1, BE) block of scores.
# --------------------------------------------------------------------------
def _edge_score_kernel(src_ref, dst_ref, h_ref, o_ref, hu_ref, hv_ref, *,
                       block_edges):
    eb = pl.program_id(0)
    e0 = eb * block_edges

    def gather(j, carry):
        s = src_ref[e0 + j]
        d = dst_ref[e0 + j]
        hu_ref[pl.ds(j, 1), :] = h_ref[pl.ds(s, 1), :]
        hv_ref[pl.ds(j, 1), :] = h_ref[pl.ds(d, 1), :]
        return carry

    lax.fori_loop(0, block_edges, gather, 0)

    q = hu_ref[...] * hv_ref[...]                        # (BE, OUT_pad) f32
    ones = jnp.ones((1, q.shape[1]), jnp.float32)
    # (1, D) x (BE, D) contracted on D  ->  (1, BE)  lane-dense score row.
    o_ref[...] = lax.dot_general(
        ones, q, (((1,), (1,)), ((), ())),
        preferred_element_type=jnp.float32)


def _edge_scores(h2_pad, src_idx, dst_idx, *, block_edges):
    n_pad, f_out = h2_pad.shape
    e_pad = src_idx.shape[0]
    grid = (e_pad // block_edges,)
    kernel = functools.partial(_edge_score_kernel, block_edges=block_edges)
    return pl.pallas_call(
        kernel,
        out_shape=jax.ShapeDtypeStruct((1, e_pad), jnp.float32),
        grid_spec=pltpu.PrefetchScalarGridSpec(
            num_scalar_prefetch=2,           # src_idx, dst_idx -> SMEM
            grid=grid,
            in_specs=[pl.BlockSpec((n_pad, f_out), lambda eb, s, d: (0, 0))],
            out_specs=pl.BlockSpec((1, block_edges), lambda eb, s, d: (0, eb)),
            scratch_shapes=[pltpu.VMEM((block_edges, f_out), jnp.float32),
                            pltpu.VMEM((block_edges, f_out), jnp.float32)],
        ),
        compiler_params=pltpu.CompilerParams(
            dimension_semantics=("parallel",)),
    )(src_idx, dst_idx, h2_pad)


# --------------------------------------------------------------------------
# Wrapper: pad/align, run the three kernels, slice back to logical shape.
# --------------------------------------------------------------------------
def model_forward(x, a_mean, params, src_idx, dst_idx, *,
                  block_rows=128, block_edges=128):
    n, f_in = x.shape
    e = src_idx.shape[0]
    hid = params["w1_self"].shape[1]
    out = params["w2_self"].shape[1]

    n_pad = _round_up(max(n, 1), max(block_rows, 128))
    f_pad = _round_up(f_in, 128)
    hid_pad = _round_up(hid, 128)
    out_pad = _round_up(out, 128)
    e_pad = _round_up(max(e, 1), max(block_edges, 128))

    bf16 = jnp.bfloat16
    x_p = _pad2(x, (n_pad, f_pad), bf16)
    a_p = _pad2(a_mean, (n_pad, n_pad), bf16)
    w1s = _pad2(params["w1_self"], (f_pad, hid_pad), bf16)
    w1n = _pad2(params["w1_neigh"], (f_pad, hid_pad), bf16)
    b1 = _pad2(params["b1"], (1, hid_pad), jnp.float32)
    w2s = _pad2(params["w2_self"], (hid_pad, out_pad), bf16)
    w2n = _pad2(params["w2_neigh"], (hid_pad, out_pad), bf16)
    b2 = _pad2(params["b2"], (1, out_pad), jnp.float32)
    src_p = jnp.zeros((e_pad,), jnp.int32).at[:e].set(src_idx.astype(jnp.int32))
    dst_p = jnp.zeros((e_pad,), jnp.int32).at[:e].set(dst_idx.astype(jnp.int32))

    h1 = _sage_layer(a_p, x_p, w1s, w1n, b1, block_rows=block_rows,
                     apply_relu=True, out_dtype=bf16)
    h2 = _sage_layer(a_p, h1, w2s, w2n, b2, block_rows=block_rows,
                     apply_relu=False, out_dtype=jnp.float32)
    scores_row = _edge_scores(h2, src_p, dst_p, block_edges=block_edges)
    return scores_row[0, :e][:, None]                    # (E, 1)


def build_graph_mean_adj(n_nodes, src, dst):
    """Dense mean-normalized adjacency (host-side glue)."""
    adj = np.zeros((n_nodes, n_nodes), dtype=np.float32)
    adj[dst, src] = 1.0                       # row i collects from in-neighbors
    indeg = adj.sum(axis=1, keepdims=True)
    return jnp.asarray(adj / np.maximum(indeg, 1.0))   # zero-indeg rows -> 0


def init_params(key, in_feats, hid_feats, out_feats):
    ks = jax.random.split(key, 4)
    s1 = 1.0 / np.sqrt(in_feats)
    s2 = 1.0 / np.sqrt(hid_feats)
    return {
        "w1_self": jax.random.normal(ks[0], (in_feats, hid_feats), jnp.float32) * s1,
        "w1_neigh": jax.random.normal(ks[1], (in_feats, hid_feats), jnp.float32) * s1,
        "b1": jnp.zeros((1, hid_feats), jnp.float32),
        "w2_self": jax.random.normal(ks[2], (hid_feats, out_feats), jnp.float32) * s2,
        "w2_neigh": jax.random.normal(ks[3], (hid_feats, out_feats), jnp.float32) * s2,
        "b2": jnp.zeros((1, out_feats), jnp.float32),
    }


def reference_forward(x, a_mean, params, src, dst):
    """Pure-JAX reference with the same bf16-operand / f32-accum math."""
    bf = lambda t: t.astype(jnp.bfloat16)
    f32 = jnp.float32
    agg1 = jnp.dot(bf(a_mean), bf(x), preferred_element_type=f32)
    h1 = (jnp.dot(bf(x), bf(params["w1_self"]), preferred_element_type=f32)
          + jnp.dot(bf(agg1), bf(params["w1_neigh"]), preferred_element_type=f32)
          + params["b1"])
    h1 = jnp.maximum(h1, 0.0).astype(jnp.bfloat16)
    agg2 = jnp.dot(bf(a_mean), h1, preferred_element_type=f32)
    h2 = (jnp.dot(h1, bf(params["w2_self"]), preferred_element_type=f32)
          + jnp.dot(bf(agg2), bf(params["w2_neigh"]), preferred_element_type=f32)
          + params["b2"])
    return jnp.sum(h2[src] * h2[dst], axis=-1, keepdims=True)


if __name__ == "__main__":
    N_NODES = 16
    IN_FEATS, HID_FEATS, OUT_FEATS = 8, 32, 16

    # Deterministic small graph: a ring plus chords (every node has indeg >= 1).
    src_np = np.concatenate([np.arange(N_NODES),
                             np.arange(N_NODES)]).astype(np.int32)
    dst_np = np.concatenate([(np.arange(N_NODES) + 1) % N_NODES,
                             (np.arange(N_NODES) + 5) % N_NODES]).astype(np.int32)
    E = src_np.shape[0]  # 32 edges

    key = jax.random.PRNGKey(0)
    k_x, k_p = jax.random.split(key)
    x = jax.random.normal(k_x, (N_NODES, IN_FEATS), jnp.float32)
    params = init_params(k_p, IN_FEATS, HID_FEATS, OUT_FEATS)

    a_mean = build_graph_mean_adj(N_NODES, src_np, dst_np)
    src_j = jnp.asarray(src_np)
    dst_j = jnp.asarray(dst_np)

    scores = model_forward(x, a_mean, params, src_j, dst_j)
    jax.block_until_ready(scores)

    ref = reference_forward(x, a_mean, params, src_j, dst_j)
    np.testing.assert_allclose(np.asarray(scores), np.asarray(ref),
                               rtol=2e-2, atol=2e-2)
    assert scores.shape == (E, 1)
    print("KERNEL_OK")
</pallas_src>

<mosaic_0001>
module attributes {stable_mosaic.version = 11 : i64} {
  func.func @_sage_layer_kernel(%arg0: i32, %arg1: memref<128x128xbf16, #tpu.memory_space<vmem>>, %arg2: memref<128x128xbf16, #tpu.memory_space<vmem>>, %arg3: memref<128x128xbf16, #tpu.memory_space<vmem>>, %arg4: memref<128x128xbf16, #tpu.memory_space<vmem>>, %arg5: memref<1x128xf32, #tpu.memory_space<vmem>>, %arg6: memref<128x128xbf16, #tpu.memory_space<vmem>>) attributes {dimension_semantics = [#tpu.dimension_semantics<parallel>], iteration_bounds = array<i64: 1>, scalar_prefetch = 0 : i64, scratch_operands = 0 : i64, tpu.core_type = #tpu.core_type<tc>, window_params = [{transform_indices = @transform_0, window_bounds = array<i64: 128, 128>}, {pipeline_mode = #tpu.pipeline_mode<synchronous>, transform_indices = @transform_1, window_bounds = array<i64: 128, 128>}, {pipeline_mode = #tpu.pipeline_mode<synchronous>, transform_indices = @transform_2, window_bounds = array<i64: 128, 128>}, {pipeline_mode = #tpu.pipeline_mode<synchronous>, transform_indices = @transform_3, window_bounds = array<i64: 128, 128>}, {pipeline_mode = #tpu.pipeline_mode<synchronous>, transform_indices = @transform_4, window_bounds = array<i64: 1, 128>}, {transform_indices = @transform_5, window_bounds = array<i64: 128, 128>}]} {
    %c128_i32 = arith.constant 128 : i32
    %0 = arith.muli %arg0, %c128_i32 : i32
    %1 = tpu.assume_multiple %0, 128 : i32
    %c0 = arith.constant 0 : index
    %c0_0 = arith.constant 0 : index
    %2 = vector.load %arg2[%c0, %c0_0] : memref<128x128xbf16, #tpu.memory_space<vmem>>, vector<128x128xbf16>
    %3 = arith.index_cast %1 : i32 to index
    %c0_1 = arith.constant 0 : index
    %4 = vector.load %arg2[%3, %c0_1] : memref<128x128xbf16, #tpu.memory_space<vmem>>, vector<128x128xbf16>
    %c0_2 = arith.constant 0 : index
    %c0_3 = arith.constant 0 : index
    %5 = vector.load %arg1[%c0_2, %c0_3] : memref<128x128xbf16, #tpu.memory_space<vmem>>, vector<128x128xbf16>
    %cst = arith.constant dense<0.000000e+00> : vector<128x128xf32>
    %6 = tpu.matmul %5, %2, %cst {dimension_numbers = #tpu.dot_dimension_numbers<[1], [0], [0], [1], [0, 0, 1, 1], [], []>} : vector<128x128xbf16>, vector<128x128xbf16>, vector<128x128xf32> -> vector<128x128xf32>
    %c0_4 = arith.constant 0 : index
    %c0_5 = arith.constant 0 : index
    %7 = vector.load %arg3[%c0_4, %c0_5] : memref<128x128xbf16, #tpu.memory_space<vmem>>, vector<128x128xbf16>
    %cst_6 = arith.constant dense<0.000000e+00> : vector<128x128xf32>
    %8 = tpu.matmul %4, %7, %cst_6 {dimension_numbers = #tpu.dot_dimension_numbers<[1], [0], [0], [1], [0, 0, 1, 1], [], []>} : vector<128x128xbf16>, vector<128x128xbf16>, vector<128x128xf32> -> vector<128x128xf32>
    %9 = arith.truncf %6 : vector<128x128xf32> to vector<128x128xbf16>
    %c0_7 = arith.constant 0 : index
    %c0_8 = arith.constant 0 : index
    %10 = vector.load %arg4[%c0_7, %c0_8] : memref<128x128xbf16, #tpu.memory_space<vmem>>, vector<128x128xbf16>
    %cst_9 = arith.constant dense<0.000000e+00> : vector<128x128xf32>
    %11 = tpu.matmul %9, %10, %cst_9 {dimension_numbers = #tpu.dot_dimension_numbers<[1], [0], [0], [1], [0, 0, 1, 1], [], []>} : vector<128x128xbf16>, vector<128x128xbf16>, vector<128x128xf32> -> vector<128x128xf32>
    %12 = arith.addf %8, %11 : vector<128x128xf32>
    %c0_10 = arith.constant 0 : index
    %c0_11 = arith.constant 0 : index
    %13 = vector.load %arg5[%c0_10, %c0_11] : memref<1x128xf32, #tpu.memory_space<vmem>>, vector<1x128xf32>
    %14 = vector.broadcast %13 : vector<1x128xf32> to vector<128x128xf32>
    %15 = arith.addf %12, %14 : vector<128x128xf32>
    %cst_12 = arith.constant 0.000000e+00 : f32
    %16 = vector.broadcast %cst_12 : f32 to vector<128x128xf32>
    %17 = arith.maximumf %15, %16 : vector<128x128xf32>
    %18 = arith.truncf %17 : vector<128x128xf32> to vector<128x128xbf16>
    %c0_13 = arith.constant 0 : index
    %c0_14 = arith.constant 0 : index
    %19 = vector.load %arg6[%c0_13, %c0_14] : memref<128x128xbf16, #tpu.memory_space<vmem>>, vector<128x128xbf16>
    tpu.vector_store %arg6[%c0_13, %c0_14], %18 {strides = array<i32>} : memref<128x128xbf16, #tpu.memory_space<vmem>>, vector<128x128xbf16>,
    return
  }
  func.func @transform_0(%arg0: i32) -> (i32, i32) {
    %c0_i32 = arith.constant 0 : i32
    %c0_i32_0 = arith.constant 0 : i32
    return %arg0, %c0_i32 : i32, i32
  }
  func.func @transform_1(%arg0: i32) -> (i32, i32) {
    %c0_i32 = arith.constant 0 : i32
    %c0_i32_0 = arith.constant 0 : i32
    %c0_i32_1 = arith.constant 0 : i32
    return %c0_i32, %c0_i32_0 : i32, i32
  }
  func.func @transform_2(%arg0: i32) -> (i32, i32) {
    %c0_i32 = arith.constant 0 : i32
    %c0_i32_0 = arith.constant 0 : i32
    %c0_i32_1 = arith.constant 0 : i32
    return %c0_i32, %c0_i32_0 : i32, i32
  }
  func.func @transform_3(%arg0: i32) -> (i32, i32) {
    %c0_i32 = arith.constant 0 : i32
    %c0_i32_0 = arith.constant 0 : i32
    %c0_i32_1 = arith.constant 0 : i32
    return %c0_i32, %c0_i32_0 : i32, i32
  }
  func.func @transform_4(%arg0: i32) -> (i32, i32) {
    %c0_i32 = arith.constant 0 : i32
    %c0_i32_0 = arith.constant 0 : i32
    %c0_i32_1 = arith.constant 0 : i32
    return %c0_i32, %c0_i32_0 : i32, i32
  }
  func.func @transform_5(%arg0: i32) -> (i32, i32) {
    %c0_i32 = arith.constant 0 : i32
    %c0_i32_0 = arith.constant 0 : i32
    return %arg0, %c0_i32 : i32, i32
  }
}

</mosaic_0001>

<llo_original>
// kernel: tpu_custom_call.1
$region0: #{tpu_custom_call.1}
  #allocation0 [shape = 'u32[]', space=smem, size = 0x4, offset = 0x4, fixed_abs, tag = 'smem constant byte address 0x4 - core index']
  #allocation1 [shape = 'u32[72,128]{1,0:T(1,128)}', space=vmem, size = 0x9000, scoped, tag = 'internal scratch']
  %s0 = inlined_call_operand.hbm [shape: bf16[128,128], index: 0, kind: input, shape index: {}]
  %s1 = inlined_call_operand.hbm [shape: bf16[128,128], index: 1, kind: input, shape index: {}]
  %s2 = inlined_call_operand.hbm [shape: bf16[128,128], index: 2, kind: input, shape index: {}]
  %s3 = inlined_call_operand.hbm [shape: bf16[128,128], index: 3, kind: input, shape index: {}]
  %s4 = inlined_call_operand.vmem [shape: f32[1,128], index: 4, kind: input, shape index: {}]
  %s5 = inlined_call_operand.hbm [shape: bf16[128,128], index: 5, kind: output, shape index: {}]
  %s6 = sld [smem:[#allocation0]]
  $region46: #{tpu_custom_call.1} parent=0
    _
  %s8 = ssub.s32 1, %s6
  %s9 = scalar_select 0, %s8, %s6
  $region1: #{tpu_custom_call.1} parent=0
    #allocation2 [shape = 'u8[32768]{0}', space=vmem, size = 0x8000, scoped, tag = 'input window, operand 0, single buffered']
    #allocation3 [shape = 's32[1]{0}', space=sflag, size = 0x4, scoped, tag = 'scoped memory for tpu_custom_call.1']
    #allocation4 [shape = 's32[1]{0}', space=sflag, size = 0x4, scoped, tag = 'scoped memory for tpu_custom_call.1']
    #allocation5 [shape = 'u8[32768]{0}', space=vmem, size = 0x8000, scoped, tag = 'input window, operand 1, single buffered']
    #allocation6 [shape = 's32[1]{0}', space=sflag, size = 0x4, scoped, tag = 'scoped memory for tpu_custom_call.1']
    #allocation7 [shape = 'u8[32768]{0}', space=vmem, size = 0x8000, scoped, tag = 'input window, operand 2, single buffered']
    #allocation8 [shape = 'u8[32768]{0}', space=vmem, size = 0x8000, scoped, tag = 'input window, operand 3, single buffered']
    #allocation9 [shape = 's32[1]{0}', space=sflag, size = 0x4, scoped, tag = 'scoped memory for tpu_custom_call.1']
    #allocation10 [shape = 'u8[32768]{0}', space=vmem, size = 0x8000, scoped, tag = 'output window, operand 0, single buffered']
    %10 = vsyncpa [#allocation3], 0
    %11 = vsyncpa [#allocation6], 0
    %12 = vsyncpa [#allocation9], 0
    %13 = vsyncpa [#allocation4], 0
    // Predicated region
    $region2: #{tpu_custom_call.1} parent=1 // pred_check
      _
    $region3: #{tpu_custom_call.1} parent=1 // pred_check_branch
      %15 = sbr.rel (0) target = $region5
    $region4: #{tpu_custom_call.1} parent=1 // pred_region
      %17 = vsyncadd [#allocation3], 0
      %s18 = sshll.u32 %s0, 4
      %s19 = int_to_ptr.hbm [resolvable:$true] %s18
      %s20 = sshll.u32 [#allocation2], 4
      %s21 = int_to_ptr.vmem [resolvable:$true] %s20
      %26 = dma.hbm_to_vmem [thread:$0]  %s19, 1024, %s21, [#allocation3], 64, 64, 4
    $region5: #{tpu_custom_call.1} parent=1 // pred_fallthru
      _
    // Predicated region
    $region6: #{tpu_custom_call.1} parent=1 // pred_check
      _
    $region7: #{tpu_custom_call.1} parent=1 // pred_check_branch
      %28 = sbr.rel (0) target = $region9
    $region8: #{tpu_custom_call.1} parent=1 // pred_region
      %30 = vsyncadd [#allocation6], 0
      %s31 = sshll.u32 %s1, 4
      %s32 = int_to_ptr.hbm [resolvable:$true] %s31
      %s33 = sshll.u32 [#allocation5], 4
      %s34 = int_to_ptr.vmem [resolvable:$true] %s33
      %39 = dma.hbm_to_vmem [thread:$0]  %s32, 1024, %s34, [#allocation6], 64, 64, 4
    $region9: #{tpu_custom_call.1} parent=1 // pred_fallthru
      _
    // Predicated region
    $region10: #{tpu_custom_call.1} parent=1 // pred_check
      _
    $region11: #{tpu_custom_call.1} parent=1 // pred_check_branch
      %41 = sbr.rel (0) target = $region13
    $region12: #{tpu_custom_call.1} parent=1 // pred_region
      %43 = vsyncadd [#allocation6], 0
      %s44 = sshll.u32 %s2, 4
      %s45 = int_to_ptr.hbm [resolvable:$true] %s44
      %s46 = sshll.u32 [#allocation7], 4
      %s47 = int_to_ptr.vmem [resolvable:$true] %s46
      %52 = dma.hbm_to_vmem [thread:$0]  %s45, 1024, %s47, [#allocation6], 64, 64, 4
    $region13: #{tpu_custom_call.1} parent=1 // pred_fallthru
      _
    // Predicated region
    $region14: #{tpu_custom_call.1} parent=1 // pred_check
      _
    $region15: #{tpu_custom_call.1} parent=1 // pred_check_branch
      %54 = sbr.rel (0) target = $region17
    $region16: #{tpu_custom_call.1} parent=1 // pred_region
      %56 = vsyncadd [#allocation9], 0
      %s57 = sshll.u32 %s3, 4
      %s58 = int_to_ptr.hbm [resolvable:$true] %s57
      %s59 = sshll.u32 [#allocation8], 4
      %s60 = int_to_ptr.vmem [resolvable:$true] %s59
      %65 = dma.hbm_to_vmem [thread:$0]  %s58, 1024, %s60, [#allocation9], 64, 64, 4
    $region17: #{tpu_custom_call.1} parent=1 // pred_fallthru
      _
    // Predicated region
    $region18: #{tpu_custom_call.1} parent=1 // pred_check
      _
    $region19: #{tpu_custom_call.1} parent=1 // pred_check_branch
      %67 = sbr.rel (0) target = $region21
    $region20: #{tpu_custom_call.1} parent=1 // pred_region
      _
    $region21: #{tpu_custom_call.1} parent=1 // pred_fallthru
      _
    // Predicated region
    $region22: #{tpu_custom_call.1} parent=1 // pred_check
      _
    $region23: #{tpu_custom_call.1} parent=1 // pred_check_branch
      %69 = sbr.rel (0) target = $region25
    $region24: #{tpu_custom_call.1} parent=1 // pred_region
      %71 = dma.done [#allocation3], 1024
    $region25: #{tpu_custom_call.1} parent=1 // pred_fallthru
      _
    // Predicated region
    $region26: #{tpu_custom_call.1} parent=1 // pred_check
      _
    $region27: #{tpu_custom_call.1} parent=1 // pred_check_branch
      %73 = sbr.rel (0) target = $region29
    $region28: #{tpu_custom_call.1} parent=1 // pred_region
      %75 = dma.done [#allocation6], 1024
    $region29: #{tpu_custom_call.1} parent=1 // pred_fallthru
      _
    // Predicated region
    $region30: #{tpu_custom_call.1} parent=1 // pred_check
      _
    $region31: #{tpu_custom_call.1} parent=1 // pred_check_branch
      %77 = sbr.rel (0) target = $region33
    $region32: #{tpu_custom_call.1} parent=1 // pred_region
      %79 = dma.done [#allocation6], 1024
    $region33: #{tpu_custom_call.1} parent=1 // pred_fallthru
      _
    // Predicated region
    $region34: #{tpu_custom_call.1} parent=1 // pred_check
      _
    $region35: #{tpu_custom_call.1} parent=1 // pred_check_branch
      %81 = sbr.rel (0) target = $region37
    $region36: #{tpu_custom_call.1} parent=1 // pred_region
      %83 = dma.done [#allocation9], 1024
    $region37: #{tpu_custom_call.1} parent=1 // pred_fallthru
      _
    %s84 = smul.u32 0, 128
    %v85 = vld [vmem:[#allocation5] sm:$0xf]
    %v86 = vld [vmem:[#allocation5 + $0x4] sm:$0xf]
    %v87 = vld [vmem:[#allocation5 + $0x8] sm:$0xf]
    %v88 = vld [vmem:[#allocation5 + $0xc] sm:$0xf]
    %v89 = vld [vmem:[#allocation5 + $0x10] sm:$0xf]
    %v90 = vld [vmem:[#allocation5 + $0x14] sm:$0xf]
    %v91 = vld [vmem:[#allocation5 + $0x18] sm:$0xf]
    %v92 = vld [vmem:[#allocation5 + $0x1c] sm:$0xf]
    %v93 = vld [vmem:[#allocation5 + $0x20] sm:$0xf]
    %v94 = vld [vmem:[#allocation5 + $0x24] sm:$0xf]
    %v95 = vld [vmem:[#allocation5 + $0x28] sm:$0xf]
    %v96 = vld [vmem:[#allocation5 + $0x2c] sm:$0xf]
    %v97 = vld [vmem:[#allocation5 + $0x30] sm:$0xf]
    %v98 = vld [vmem:[#allocation5 + $0x34] sm:$0xf]
    %v99 = vld [vmem:[#allocation5 + $0x38] sm:$0xf]
    %v100 = vld [vmem:[#allocation5 + $0x3c] sm:$0xf]
    %s101 = sshra.s32 %s84, 3
    %s102 = sand.u32 %s84, 7
    %s103 = smul.addr %s101, 4
    %s104 = scalar_lea.vmem [#allocation5], %s103
    %v105 = vld [vmem:[%s104] sm:$0xf]
    %v106 = vld [vmem:[%s104 + $0x4] sm:$0xf]
    %v107 = vld [vmem:[%s104 + $0x8] sm:$0xf]
    %v108 = vld [vmem:[%s104 + $0xc] sm:$0xf]
    %v109 = vld [vmem:[%s104 + $0x10] sm:$0xf]
    %v110 = vld [vmem:[%s104 + $0x14] sm:$0xf]
    %v111 = vld [vmem:[%s104 + $0x18] sm:$0xf]
    %v112 = vld [vmem:[%s104 + $0x1c] sm:$0xf]
    %v113 = vld [vmem:[%s104 + $0x20] sm:$0xf]
    %v114 = vld [vmem:[%s104 + $0x24] sm:$0xf]
    %v115 = vld [vmem:[%s104 + $0x28] sm:$0xf]
    %v116 = vld [vmem:[%s104 + $0x2c] sm:$0xf]
    %v117 = vld [vmem:[%s104 + $0x30] sm:$0xf]
    %v118 = vld [vmem:[%s104 + $0x34] sm:$0xf]
    %v119 = vld [vmem:[%s104 + $0x38] sm:$0xf]
    %v120 = vld [vmem:[%s104 + $0x3c] sm:$0xf]
    %v121 = vld [vmem:[#allocation2] sm:$0xf]
    %v122 = vld [vmem:[#allocation2 + $0x4] sm:$0xf]
    %v123 = vld [vmem:[#allocation2 + $0x8] sm:$0xf]
    %v124 = vld [vmem:[#allocation2 + $0xc] sm:$0xf]
    %v125 = vld [vmem:[#allocation2 + $0x10] sm:$0xf]
    %v126 = vld [vmem:[#allocation2 + $0x14] sm:$0xf]
    %v127 = vld [vmem:[#allocation2 + $0x18] sm:$0xf]
    %v128 = vld [vmem:[#allocation2 + $0x1c] sm:$0xf]
    %v129 = vld [vmem:[#allocation2 + $0x20] sm:$0xf]
    %v130 = vld [vmem:[#allocation2 + $0x24] sm:$0xf]
    %v131 = vld [vmem:[#allocation2 + $0x28] sm:$0xf]
    %v132 = vld [vmem:[#allocation2 + $0x2c] sm:$0xf]
    %v133 = vld [vmem:[#allocation2 + $0x30] sm:$0xf]
    %v134 = vld [vmem:[#allocation2 + $0x34] sm:$0xf]
    %v135 = vld [vmem:[#allocation2 + $0x38] sm:$0xf]
    %v136 = vld [vmem:[#allocation2 + $0x3c] sm:$0xf]
    %v153 = vunpack.c.l.b16 %v121
    %v154 = vunpack.c.l.b16 %v122
    %v155 = vunpack.c.l.b16 %v123
    %v156 = vunpack.c.l.b16 %v124
    %v157 = vunpack.c.l.b16 %v125
    %v158 = vunpack.c.l.b16 %v126
    %v159 = vunpack.c.l.b16 %v127
    %v160 = vunpack.c.l.b16 %v128
    %v161 = vunpack.c.l.b16 %v129
    %v162 = vunpack.c.l.b16 %v130
    %v163 = vunpack.c.l.b16 %v131
    %v164 = vunpack.c.l.b16 %v132
    %v165 = vunpack.c.l.b16 %v133
    %v166 = vunpack.c.l.b16 %v134
    %v167 = vunpack.c.l.b16 %v135
    %v168 = vunpack.c.l.b16 %v136
    %v169 = vpack.c.b16 %v154, %v153
    %v170 = vpack.c.b16 %v156, %v155
    %v171 = vpack.c.b16 %v158, %v157
    %v172 = vpack.c.b16 %v160, %v159
    %v173 = vpack.c.b16 %v162, %v161
    %v174 = vpack.c.b16 %v164, %v163
    %v175 = vpack.c.b16 %v166, %v165
    %v176 = vpack.c.b16 %v168, %v167
    %v201 = vunpack.c.l.b16 %v85
    %v202 = vunpack.c.l.b16 %v86
    %v203 = vunpack.c.l.b16 %v87
    %v204 = vunpack.c.l.b16 %v88
    %v205 = vunpack.c.l.b16 %v89
    %v206 = vunpack.c.l.b16 %v90
    %v207 = vunpack.c.l.b16 %v91
    %v208 = vunpack.c.l.b16 %v92
    %v209 = vunpack.c.l.b16 %v93
    %v210 = vunpack.c.l.b16 %v94
    %v211 = vunpack.c.l.b16 %v95
    %v212 = vunpack.c.l.b16 %v96
    %v213 = vunpack.c.l.b16 %v97
    %v214 = vunpack.c.l.b16 %v98
    %v215 = vunpack.c.l.b16 %v99
    %v216 = vunpack.c.l.b16 %v100
    %v217 = vpack.c.b16 %v202, %v201
    %v218 = vpack.c.b16 %v204, %v203
    %v219 = vpack.c.b16 %v206, %v205
    %v220 = vpack.c.b16 %v208, %v207
    %v221 = vpack.c.b16 %v210, %v209
    %v222 = vpack.c.b16 %v212, %v211
    %v223 = vpack.c.b16 %v214, %v213
    %v224 = vpack.c.b16 %v216, %v215
    %233 = vmatpush.bf16.msra.mxu0 %v224
    %234 = vmatpush.bf16.msra.mxu0 %v223
    %235 = vmatpush.bf16.msra.mxu0 %v222
    %236 = vmatpush.bf16.msra.mxu0 %v221
    %237 = vmatpush.bf16.msra.mxu0 %v220
    %238 = vmatpush.bf16.msra.mxu0 %v219
    %239 = vmatpush.bf16.msra.mxu0 %v218
    %240 = vmatpush.bf16.msra.mxu0 %v217
    %241 = vmatmul.bf16.gmra.mxu0 %v169
    %v242 = vpop.f32.mrf.mxu0
    %v243 = vadd.f32 0.0, %v242
    %v244 = vpop.f32.mrf.mxu0
    %v245 = vadd.f32 0.0, %v244
    %246 = vmatmul.bf16.gmra.mxu0 %v170
    %v247 = vpop.f32.mrf.mxu0
    %v248 = vadd.f32 0.0, %v247
    %v249 = vpop.f32.mrf.mxu0
    %v250 = vadd.f32 0.0, %v249
    %251 = vmatmul.bf16.gmra.mxu0 %v171
    %v252 = vpop.f32.mrf.mxu0
    %v253 = vadd.f32 0.0, %v252
    %v254 = vpop.f32.mrf.mxu0
    %v255 = vadd.f32 0.0, %v254
    %256 = vmatmul.bf16.gmra.mxu0 %v172
    %v257 = vpop.f32.mrf.mxu0
    %v258 = vadd.f32 0.0, %v257
    %v259 = vpop.f32.mrf.mxu0
    %v260 = vadd.f32 0.0, %v259
    %261 = vmatmul.bf16.gmra.mxu0 %v173
    %v262 = vpop.f32.mrf.mxu0
    %v263 = vadd.f32 0.0, %v262
    %v264 = vpop.f32.mrf.mxu0
    %v265 = vadd.f32 0.0, %v264
    %266 = vmatmul.bf16.gmra.mxu0 %v174
    %v267 = vpop.f32.mrf.mxu0
    %v268 = vadd.f32 0.0, %v267
    %v269 = vpop.f32.mrf.mxu0
    %v270 = vadd.f32 0.0, %v269
    %271 = vmatmul.bf16.gmra.mxu0 %v175
    %v272 = vpop.f32.mrf.mxu0
    %v273 = vadd.f32 0.0, %v272
    %v274 = vpop.f32.mrf.mxu0
    %v275 = vadd.f32 0.0, %v274
    %276 = vmatmul.bf16.gmra.mxu0 %v176
    %v277 = vpop.f32.mrf.mxu0
    %v278 = vadd.f32 0.0, %v277
    %v279 = vpop.f32.mrf.mxu0
    %v280 = vadd.f32 0.0, %v279
    %281 = vdwg.mxu0
    %v282 = vld [vmem:[#allocation7] sm:$0xf]
    %v283 = vld [vmem:[#allocation7 + $0x4] sm:$0xf]
    %v284 = vld [vmem:[#allocation7 + $0x8] sm:$0xf]
    %v285 = vld [vmem:[#allocation7 + $0xc] sm:$0xf]
    %v286 = vld [vmem:[#allocation7 + $0x10] sm:$0xf]
    %v287 = vld [vmem:[#allocation7 + $0x14] sm:$0xf]
    %v288 = vld [vmem:[#allocation7 + $0x18] sm:$0xf]
    %v289 = vld [vmem:[#allocation7 + $0x1c] sm:$0xf]
    %v290 = vld [vmem:[#allocation7 + $0x20] sm:$0xf]
    %v291 = vld [vmem:[#allocation7 + $0x24] sm:$0xf]
    %v292 = vld [vmem:[#allocation7 + $0x28] sm:$0xf]
    %v293 = vld [vmem:[#allocation7 + $0x2c] sm:$0xf]
    %v294 = vld [vmem:[#allocation7 + $0x30] sm:$0xf]
    %v295 = vld [vmem:[#allocation7 + $0x34] sm:$0xf]
    %v296 = vld [vmem:[#allocation7 + $0x38] sm:$0xf]
    %v297 = vld [vmem:[#allocation7 + $0x3c] sm:$0xf]
    %v298 = vpack.c.bf16 %v245, %v243
    %v299 = vpack.c.bf16 %v250, %v248
    %v300 = vpack.c.bf16 %v255, %v253
    %v301 = vpack.c.bf16 %v260, %v258
    %v302 = vpack.c.bf16 %v265, %v263
    %v303 = vpack.c.bf16 %v270, %v268
    %v304 = vpack.c.bf16 %v275, %v273
    %v305 = vpack.c.bf16 %v280, %v278
    %v306 = vld [vmem:[#allocation8] sm:$0xf]
    %v307 = vld [vmem:[#allocation8 + $0x4] sm:$0xf]
    %v308 = vld [vmem:[#allocation8 + $0x8] sm:$0xf]
    %v309 = vld [vmem:[#allocation8 + $0xc] sm:$0xf]
    %v310 = vld [vmem:[#allocation8 + $0x10] sm:$0xf]
    %v311 = vld [vmem:[#allocation8 + $0x14] sm:$0xf]
    %v312 = vld [vmem:[#allocation8 + $0x18] sm:$0xf]
    %v313 = vld [vmem:[#allocation8 + $0x1c] sm:$0xf]
    %v314 = vld [vmem:[#allocation8 + $0x20] sm:$0xf]
    %v315 = vld [vmem:[#allocation8 + $0x24] sm:$0xf]
    %v316 = vld [vmem:[#allocation8 + $0x28] sm:$0xf]
    %v317 = vld [vmem:[#allocation8 + $0x2c] sm:$0xf]
    %v318 = vld [vmem:[#allocation8 + $0x30] sm:$0xf]
    %v319 = vld [vmem:[#allocation8 + $0x34] sm:$0xf]
    %v320 = vld [vmem:[#allocation8 + $0x38] sm:$0xf]
    %v321 = vld [vmem:[#allocation8 + $0x3c] sm:$0xf]
    %v338 = vunpack.c.l.b16 %v306
    %v339 = vunpack.c.l.b16 %v307
    %v340 = vunpack.c.l.b16 %v308
    %v341 = vunpack.c.l.b16 %v309
    %v342 = vunpack.c.l.b16 %v310
    %v343 = vunpack.c.l.b16 %v311
    %v344 = vunpack.c.l.b16 %v312
    %v345 = vunpack.c.l.b16 %v313
    %v346 = vunpack.c.l.b16 %v314
    %v347 = vunpack.c.l.b16 %v315
    %v348 = vunpack.c.l.b16 %v316
    %v349 = vunpack.c.l.b16 %v317
    %v350 = vunpack.c.l.b16 %v318
    %v351 = vunpack.c.l.b16 %v319
    %v352 = vunpack.c.l.b16 %v320
    %v353 = vunpack.c.l.b16 %v321
    %v354 = vpack.c.b16 %v339, %v338
    %v355 = vpack.c.b16 %v341, %v340
    %v356 = vpack.c.b16 %v343, %v342
    %v357 = vpack.c.b16 %v345, %v344
    %v358 = vpack.c.b16 %v347, %v346
    %v359 = vpack.c.b16 %v349, %v348
    %v360 = vpack.c.b16 %v351, %v350
    %v361 = vpack.c.b16 %v353, %v352
    %370 = vmatpush.bf16.msra.mxu0 %v361
    %371 = vmatpush.bf16.msra.mxu0 %v360
    %372 = vmatpush.bf16.msra.mxu0 %v359
    %373 = vmatpush.bf16.msra.mxu0 %v358
    %374 = vmatpush.bf16.msra.mxu0 %v357
    %375 = vmatpush.bf16.msra.mxu0 %v356
    %376 = vmatpush.bf16.msra.mxu0 %v355
    %377 = vmatpush.bf16.msra.mxu0 %v354
    %378 = vmatmul.bf16.gmra.mxu0 %v298
    %v379 = vpop.f32.mrf.mxu0
    %v380 = vadd.f32 0.0, %v379
    %v381 = vpop.f32.mrf.mxu0
    %v382 = vadd.f32 0.0, %v381
    %383 = vmatmul.bf16.gmra.mxu0 %v299
    %v384 = vpop.f32.mrf.mxu0
    %v385 = vadd.f32 0.0, %v384
    %v386 = vpop.f32.mrf.mxu0
    %v387 = vadd.f32 0.0, %v386
    %388 = vmatmul.bf16.gmra.mxu0 %v300
    %v389 = vpop.f32.mrf.mxu0
    %v390 = vadd.f32 0.0, %v389
    %v391 = vpop.f32.mrf.mxu0
    %v392 = vadd.f32 0.0, %v391
    %393 = vmatmul.bf16.gmra.mxu0 %v301
    %v394 = vpop.f32.mrf.mxu0
    %v395 = vadd.f32 0.0, %v394
    %v396 = vpop.f32.mrf.mxu0
    %v397 = vadd.f32 0.0, %v396
    %398 = vmatmul.bf16.gmra.mxu0 %v302
    %v399 = vpop.f32.mrf.mxu0
    %v400 = vadd.f32 0.0, %v399
    %v401 = vpop.f32.mrf.mxu0
    %v402 = vadd.f32 0.0, %v401
    %403 = vmatmul.bf16.gmra.mxu0 %v303
    %v404 = vpop.f32.mrf.mxu0
    %v405 = vadd.f32 0.0, %v404
    %v406 = vpop.f32.mrf.mxu0
    %v407 = vadd.f32 0.0, %v406
    %408 = vmatmul.bf16.gmra.mxu0 %v304
    %v409 = vpop.f32.mrf.mxu0
    %v410 = vadd.f32 0.0, %v409
    %v411 = vpop.f32.mrf.mxu0
    %v412 = vadd.f32 0.0, %v411
    %413 = vmatmul.bf16.gmra.mxu0 %v305
    %v414 = vpop.f32.mrf.mxu0
    %v415 = vadd.f32 0.0, %v414
    %v416 = vpop.f32.mrf.mxu0
    %v417 = vadd.f32 0.0, %v416
    %418 = vdwg.mxu0
    %v435 = vunpack.c.l.b16 %v105
    %v436 = vunpack.c.l.b16 %v106
    %v437 = vunpack.c.l.b16 %v107
    %v438 = vunpack.c.l.b16 %v108
    %v439 = vunpack.c.l.b16 %v109
    %v440 = vunpack.c.l.b16 %v110
    %v441 = vunpack.c.l.b16 %v111
    %v442 = vunpack.c.l.b16 %v112
    %v443 = vunpack.c.l.b16 %v113
    %v444 = vunpack.c.l.b16 %v114
    %v445 = vunpack.c.l.b16 %v115
    %v446 = vunpack.c.l.b16 %v116
    %v447 = vunpack.c.l.b16 %v117
    %v448 = vunpack.c.l.b16 %v118
    %v449 = vunpack.c.l.b16 %v119
    %v450 = vunpack.c.l.b16 %v120
    %v451 = vpack.c.b16 %v436, %v435
    %v452 = vpack.c.b16 %v438, %v437
    %v453 = vpack.c.b16 %v440, %v439
    %v454 = vpack.c.b16 %v442, %v441
    %v455 = vpack.c.b16 %v444, %v443
    %v456 = vpack.c.b16 %v446, %v445
    %v457 = vpack.c.b16 %v448, %v447
    %v458 = vpack.c.b16 %v450, %v449
    %v483 = vunpack.c.l.b16 %v282
    %v484 = vunpack.c.l.b16 %v283
    %v485 = vunpack.c.l.b16 %v284
    %v486 = vunpack.c.l.b16 %v285
    %v487 = vunpack.c.l.b16 %v286
    %v488 = vunpack.c.l.b16 %v287
    %v489 = vunpack.c.l.b16 %v288
    %v490 = vunpack.c.l.b16 %v289
    %v491 = vunpack.c.l.b16 %v290
    %v492 = vunpack.c.l.b16 %v291
    %v493 = vunpack.c.l.b16 %v292
    %v494 = vunpack.c.l.b16 %v293
    %v495 = vunpack.c.l.b16 %v294
    %v496 = vunpack.c.l.b16 %v295
    %v497 = vunpack.c.l.b16 %v296
    %v498 = vunpack.c.l.b16 %v297
    %v499 = vpack.c.b16 %v484, %v483
    %v500 = vpack.c.b16 %v486, %v485
    %v501 = vpack.c.b16 %v488, %v487
    %v502 = vpack.c.b16 %v490, %v489
    %v503 = vpack.c.b16 %v492, %v491
    %v504 = vpack.c.b16 %v494, %v493
    %v505 = vpack.c.b16 %v496, %v495
    %v506 = vpack.c.b16 %v498, %v497
    %515 = vmatpush.bf16.msra.mxu0 %v506
    %516 = vmatpush.bf16.msra.mxu0 %v505
    %517 = vmatpush.bf16.msra.mxu0 %v504
    %518 = vmatpush.bf16.msra.mxu0 %v503
    %519 = vmatpush.bf16.msra.mxu0 %v502
    %520 = vmatpush.bf16.msra.mxu0 %v501
    %521 = vmatpush.bf16.msra.mxu0 %v500
    %522 = vmatpush.bf16.msra.mxu0 %v499
    %523 = vmatmul.bf16.gmra.mxu0 %v451
    %v524 = vpop.f32.mrf.mxu0
    %v525 = vadd.f32 %v380, %v524
    %v526 = vpop.f32.mrf.mxu0
    %v527 = vadd.f32 %v382, %v526
    %528 = vmatmul.bf16.gmra.mxu0 %v452
    %v529 = vpop.f32.mrf.mxu0
    %v530 = vadd.f32 %v385, %v529
    %v531 = vpop.f32.mrf.mxu0
    %v532 = vadd.f32 %v387, %v531
    %533 = vmatmul.bf16.gmra.mxu0 %v453
    %v534 = vpop.f32.mrf.mxu0
    %v535 = vadd.f32 %v390, %v534
    %v536 = vpop.f32.mrf.mxu0
    %v537 = vadd.f32 %v392, %v536
    %538 = vmatmul.bf16.gmra.mxu0 %v454
    %v539 = vpop.f32.mrf.mxu0
    %v540 = vadd.f32 %v395, %v539
    %v541 = vpop.f32.mrf.mxu0
    %v542 = vadd.f32 %v397, %v541
    %543 = vmatmul.bf16.gmra.mxu0 %v455
    %v544 = vpop.f32.mrf.mxu0
    %v545 = vadd.f32 %v400, %v544
    %v546 = vpop.f32.mrf.mxu0
    %v547 = vadd.f32 %v402, %v546
    %548 = vmatmul.bf16.gmra.mxu0 %v456
    %v549 = vpop.f32.mrf.mxu0
    %v550 = vadd.f32 %v405, %v549
    %v551 = vpop.f32.mrf.mxu0
    %v552 = vadd.f32 %v407, %v551
    %553 = vmatmul.bf16.gmra.mxu0 %v457
    %v554 = vpop.f32.mrf.mxu0
    %v555 = vadd.f32 %v410, %v554
    %v556 = vpop.f32.mrf.mxu0
    %v557 = vadd.f32 %v412, %v556
    %558 = vmatmul.bf16.gmra.mxu0 %v458
    %v559 = vpop.f32.mrf.mxu0
    %v560 = vadd.f32 %v415, %v559
    %v561 = vpop.f32.mrf.mxu0
    %v562 = vadd.f32 %v417, %v561
    %563 = vdwg.mxu0
    %v564 = vld [vmem:[%s4] sm:$0x1]
    %v566 = vperm.slane %v564, 0
    %v568 = vadd.f32 %v525, %v566
    %v569 = vadd.f32 %v527, %v566
    %v570 = vadd.f32 %v530, %v566
    %v571 = vadd.f32 %v532, %v566
    %v572 = vadd.f32 %v535, %v566
    %v573 = vadd.f32 %v537, %v566
    %v574 = vadd.f32 %v540, %v566
    %v575 = vadd.f32 %v542, %v566
    %v576 = vadd.f32 %v545, %v566
    %v577 = vadd.f32 %v547, %v566
    %v578 = vadd.f32 %v550, %v566
    %v579 = vadd.f32 %v552, %v566
    %v580 = vadd.f32 %v555, %v566
    %v581 = vadd.f32 %v557, %v566
    %v582 = vadd.f32 %v560, %v566
    %v583 = vadd.f32 %v562, %v566
    %v584 = vmax.f32 %v568, 0.0
    %v585 = vmax.f32 %v569, 0.0
    %v586 = vmax.f32 %v570, 0.0
    %v587 = vmax.f32 %v571, 0.0
    %v588 = vmax.f32 %v572, 0.0
    %v589 = vmax.f32 %v573, 0.0
    %v590 = vmax.f32 %v574, 0.0
    %v591 = vmax.f32 %v575, 0.0
    %v592 = vmax.f32 %v576, 0.0
    %v593 = vmax.f32 %v577, 0.0
    %v594 = vmax.f32 %v578, 0.0
    %v595 = vmax.f32 %v579, 0.0
    %v596 = vmax.f32 %v580, 0.0
    %v597 = vmax.f32 %v581, 0.0
    %v598 = vmax.f32 %v582, 0.0
    %v599 = vmax.f32 %v583, 0.0
    %v600 = vpack.c.bf16 %v584, %v584
    %v601 = vpack.c.bf16 %v585, %v585
    %v602 = vpack.c.bf16 %v586, %v586
    %v603 = vpack.c.bf16 %v587, %v587
    %v604 = vpack.c.bf16 %v588, %v588
    %v605 = vpack.c.bf16 %v589, %v589
    %v606 = vpack.c.bf16 %v590, %v590
    %v607 = vpack.c.bf16 %v591, %v591
    %v608 = vpack.c.bf16 %v592, %v592
    %v609 = vpack.c.bf16 %v593, %v593
    %v610 = vpack.c.bf16 %v594, %v594
    %v611 = vpack.c.bf16 %v595, %v595
    %v612 = vpack.c.bf16 %v596, %v596
    %v613 = vpack.c.bf16 %v597, %v597
    %v614 = vpack.c.bf16 %v598, %v598
    %v615 = vpack.c.bf16 %v599, %v599
    %616 = vst [vmem:[#allocation10] sm:$0xf] %v600
    %617 = vst [vmem:[#allocation10 + $0x4] sm:$0xf] %v601
    %618 = vst [vmem:[#allocation10 + $0x8] sm:$0xf] %v602
    %619 = vst [vmem:[#allocation10 + $0xc] sm:$0xf] %v603
    %620 = vst [vmem:[#allocation10 + $0x10] sm:$0xf] %v604
    %621 = vst [vmem:[#allocation10 + $0x14] sm:$0xf] %v605
    %622 = vst [vmem:[#allocation10 + $0x18] sm:$0xf] %v606
    %623 = vst [vmem:[#allocation10 + $0x1c] sm:$0xf] %v607
    %624 = vst [vmem:[#allocation10 + $0x20] sm:$0xf] %v608
    %625 = vst [vmem:[#allocation10 + $0x24] sm:$0xf] %v609
    %626 = vst [vmem:[#allocation10 + $0x28] sm:$0xf] %v610
    %627 = vst [vmem:[#allocation10 + $0x2c] sm:$0xf] %v611
    %628 = vst [vmem:[#allocation10 + $0x30] sm:$0xf] %v612
    %629 = vst [vmem:[#allocation10 + $0x34] sm:$0xf] %v613
    %630 = vst [vmem:[#allocation10 + $0x38] sm:$0xf] %v614
    %631 = vst [vmem:[#allocation10 + $0x3c] sm:$0xf] %v615
    // Predicated region
    $region38: #{tpu_custom_call.1} parent=1 // pred_check
      _
    $region39: #{tpu_custom_call.1} parent=1 // pred_check_branch
      %633 = sbr.rel (0) target = $region41
    $region40: #{tpu_custom_call.1} parent=1 // pred_region
      %635 = vsyncadd [#allocation4], 0
      %s636 = sshll.u32 [#allocation10], 4
      %s637 = int_to_ptr.vmem [resolvable:$true] %s636
      %s638 = sshll.u32 %s5, 4
      %s639 = int_to_ptr.hbm [resolvable:$true] %s638
      %644 = dma.vmem_to_hbm [thread:$0]  %s637, 1024, %s639, [#allocation4], 64, 64, 4
    $region41: #{tpu_custom_call.1} parent=1 // pred_fallthru
      _
    // Predicated region
    $region42: #{tpu_custom_call.1} parent=1 // pred_check
      _
    $region43: #{tpu_custom_call.1} parent=1 // pred_check_branch
      %646 = sbr.rel (0) target = $region45
    $region44: #{tpu_custom_call.1} parent=1 // pred_region
      %648 = dma.done [#allocation4], 1024
    $region45: #{tpu_custom_call.1} parent=1 // pred_fallthru
      _
    %649 = vsyncpa [#allocation3], 1
    %650 = vsyncpa [#allocation6], 1
    %651 = vsyncpa [#allocation9], 1
    %652 = vsyncpa [#allocation4], 1

</llo_original>
